<compile_context>
chip_gen: v6e
topology: v6e:2x2x1
jax: 0.10.0
libtpu: 0.0.40
codegen_flags: <defaults>
</compile_context>

<pallas_src>
import math
import random

import numpy as np
import jax
import jax.numpy as jnp
from jax import lax
from jax.experimental import pallas as pl
from jax.experimental.pallas import tpu as pltpu


# ----------------------------------------------------------------------------
# Host-side replication of the __init__ graph preprocessing (dense numpy in
# place of scipy.sparse — one-time init glue, not the kernel).
# ----------------------------------------------------------------------------
def calc_A_hat(adj):
    n = adj.shape[0]
    A = adj + np.eye(n)
    D = A.sum(axis=1)
    Dinv = 1.0 / np.sqrt(D)
    return Dinv[:, None] * A * Dinv[None, :]


def calc_ppr_exact(adj, alpha):
    n = adj.shape[0]
    M = calc_A_hat(adj)
    A_inner = np.eye(n) - (1.0 - alpha) * M
    return alpha * np.linalg.inv(A_inner)


def mask_adj_matrix(adj):
    n = adj.shape[0]
    masked_n_edges = 100
    influenced_n_nodes = int(math.sqrt(masked_n_edges / 2))
    influenced_nodes = random.sample(range(1, n), influenced_n_nodes)
    masked = adj.copy()
    for i in range(len(influenced_nodes)):
        for j in range(i + 1, len(influenced_nodes)):
            masked[influenced_nodes[i], influenced_nodes[j]] = 0.0
            masked[influenced_nodes[j], influenced_nodes[i]] = 0.0
    return masked


def track_ppr(adj, masked_adj, ppr_mat, alpha):
    n = adj.shape[0]
    A = masked_adj + np.eye(n)
    D = A.sum(axis=1)
    Dinv = 1.0 / np.sqrt(D)
    M = A * Dinv[None, :]                      # A @ diag(Dinv)
    A_p = adj + np.eye(n)
    D_p = A_p.sum(axis=1)
    D_p_inv = 1.0 / np.sqrt(D_p)
    M_p = A_p * D_p_inv[None, :]               # A' @ diag(Dinv')
    diff = M_p - M
    pushout = (alpha * diff) @ ppr_mat.T
    acc_pushout = pushout
    temp = alpha * M_p
    acc_pushout = acc_pushout + temp @ pushout
    num_itr = 1
    for _ in range(num_itr):
        new_temp = (temp * alpha) @ M_p
        acc_pushout = acc_pushout + new_temp @ pushout
        temp = new_temp
    return ppr_mat + acc_pushout.T


# ----------------------------------------------------------------------------
# Helpers
# ----------------------------------------------------------------------------
def _round_up(x, m):
    return ((x + m - 1) // m) * m


_VMEM_TARGET = 24 * 1024 * 1024      # keep estimated kernel footprint under this
_ISSUE_UNROLL = 8                    # DMA descriptors issued per loop iteration


def _vmem_limit_bytes(need):
    # generous slack over our own estimate, still well below v7x's 64 MiB
    return int(1.5 * need) + (8 << 20)


def _resident_need_bytes(n8, n_pad, f_pad, tb):
    # mat + pred blocks (x2 pipeline buffers), out tile (x2), idx tile (x2)
    return 4 * (2 * n8 * n_pad + 2 * n_pad * f_pad + 2 * tb * f_pad + 2 * tb)


def _gather_need_bytes(n_pad, tb, tf):
    # rows double-buffer + pred tile (x2 pipeline buffers) + out tile (x2)
    return 4 * (2 * tb * n_pad + 2 * n_pad * tf + 2 * tb * tf)


def _choose_f_tile(n_pad, f_pad, tb):
    for tf in range(f_pad, 0, -128):
        if f_pad % tf == 0 and _gather_need_bytes(n_pad, tb, tf) <= _VMEM_TARGET:
            return tf
    return 128


# ----------------------------------------------------------------------------
# Fast path (small problems): mat resident in VMEM, one-hot gather on the MXU.
# ----------------------------------------------------------------------------
def _sdg_resident_kernel(idx_ref, mat_ref, pred_ref, out_ref):
    # idx_ref : (TB, 1)        int32 row indices for this tile (VMEM)
    # mat_ref : (N8, N_pad)    f32, whole padded mat, resident
    # pred_ref: (N_pad, F_pad) f32, resident predictions
    # out_ref : (TB, F_pad)    f32 output tile
    ids = idx_ref[...]
    tb = ids.shape[0]
    n_rows = mat_ref.shape[0]
    row_iota = lax.broadcasted_iota(jnp.int32, (tb, n_rows), 1)
    onehot = (row_iota == ids).astype(jnp.float32)           # (TB, N8) gather matrix
    rows = jnp.dot(onehot, mat_ref[...], preferred_element_type=jnp.float32)
    out_ref[...] = jnp.dot(
        rows, pred_ref[...], preferred_element_type=jnp.float32
    ).astype(out_ref.dtype)


def _sdg_resident_call(idx_p, mat_p, pred_p, tb, need):
    b_pad = idx_p.shape[0]
    n8, n_pad = mat_p.shape
    _, f_pad = pred_p.shape
    idx2 = idx_p.reshape(b_pad, 1)
    return pl.pallas_call(
        _sdg_resident_kernel,
        out_shape=jax.ShapeDtypeStruct((b_pad, f_pad), jnp.float32),
        grid=(b_pad // tb,),
        in_specs=[
            pl.BlockSpec((tb, 1), lambda i: (i, 0)),
            pl.BlockSpec((n8, n_pad), lambda i: (0, 0)),      # resident, fetched once
            pl.BlockSpec((n_pad, f_pad), lambda i: (0, 0)),   # resident, fetched once
        ],
        out_specs=pl.BlockSpec((tb, f_pad), lambda i: (i, 0)),
        compiler_params=pltpu.CompilerParams(
            dimension_semantics=("parallel",),
            vmem_limit_bytes=_vmem_limit_bytes(need),
        ),
    )(idx2, mat_p, pred_p)


# ----------------------------------------------------------------------------
# Large-N path: mat stays in HBM; rows gathered by double-buffered manual DMA.
# ----------------------------------------------------------------------------
def _sdg_gather_kernel(idx_ref, mat_hbm, pred_ref, out_ref, rows_vmem, sem):
    # idx_ref  : (B_pad,)        int32, SMEM (scalar prefetch)
    # mat_hbm  : (N8, N_pad)     f32, HBM (pl.ANY) — gathered by manual DMA
    # pred_ref : (N_pad, TF)     f32, VMEM tile of predictions
    # out_ref  : (TB, TF)        f32, VMEM output tile
    # rows_vmem: (2, TB, N_pad)  f32, double-buffered gathered rows
    # sem      : (2,)            DMA semaphores, one per slot
    tb = rows_vmem.shape[1]
    b = pl.program_id(0)
    f = pl.program_id(1)
    nb = pl.num_programs(0)
    slot = b % 2
    next_slot = 1 - slot

    def issue_gather(step, dst_slot):
        base = step * tb

        @pl.loop(0, tb // _ISSUE_UNROLL)
        def _(jj):
            for u in range(_ISSUE_UNROLL):       # partial unroll of descriptor issue
                j = jj * _ISSUE_UNROLL + u
                r = idx_ref[base + j]
                pltpu.make_async_copy(
                    mat_hbm.at[pl.ds(r, 1), :],
                    rows_vmem.at[dst_slot, pl.ds(j, 1), :],
                    sem.at[dst_slot],
                ).start()

    # Prime the pipeline: gather row-tile 0 into slot 0 on the very first step.
    @pl.when(jnp.logical_and(b == 0, f == 0))
    def _():
        issue_gather(0, slot)

    # Prefetch row-tile b+1 into the other slot: overlaps this tile's matmuls.
    @pl.when(jnp.logical_and(f == 0, b + 1 < nb))
    def _():
        issue_gather(b + 1, next_slot)

    # Single aggregate wait: one descriptor covering the whole (TB, N_pad) slot;
    # its byte count equals the sum of the TB row copies started on this sem.
    @pl.when(f == 0)
    def _():
        pltpu.make_async_copy(
            mat_hbm.at[pl.ds(0, tb), :], rows_vmem.at[slot], sem.at[slot]
        ).wait()

    # One batched, lane-dense MXU matmul per (row-tile, F-tile).
    out_ref[...] = jnp.dot(
        rows_vmem[slot], pred_ref[...], preferred_element_type=jnp.float32
    ).astype(out_ref.dtype)


def _sdg_gather_call(idx_p, mat_p, pred_p, tb, tf, need):
    b_pad = idx_p.shape[0]
    n8, n_pad = mat_p.shape
    _, f_pad = pred_p.shape
    return pl.pallas_call(
        _sdg_gather_kernel,
        out_shape=jax.ShapeDtypeStruct((b_pad, f_pad), jnp.float32),
        grid_spec=pltpu.PrefetchScalarGridSpec(
            num_scalar_prefetch=1,
            grid=(b_pad // tb, f_pad // tf),
            in_specs=[
                pl.BlockSpec(memory_space=pl.ANY),                    # mat stays in HBM
                pl.BlockSpec((n_pad, tf), lambda b, f, idx: (0, f)),  # predictions tile
            ],
            out_specs=pl.BlockSpec((tb, tf), lambda b, f, idx: (b, f)),
            scratch_shapes=[
                pltpu.VMEM((2, tb, n_pad), jnp.float32),
                pltpu.SemaphoreType.DMA((2,)),
            ],
        ),
        compiler_params=pltpu.CompilerParams(
            # "arbitrary": the manual double-buffer carries state across b steps.
            dimension_semantics=("arbitrary", "arbitrary"),
            vmem_limit_bytes=_vmem_limit_bytes(need),
        ),
    )(idx_p, mat_p, pred_p)


# ----------------------------------------------------------------------------
# Public API
# ----------------------------------------------------------------------------
def sdg_prepare_mat(mat):
    """One-time padding/cast of the persistent PPR buffer (hoisted out of forward)."""
    n = mat.shape[0]
    n8 = _round_up(n, 8)
    n_pad = _round_up(n, 128)
    return jnp.zeros((n8, n_pad), jnp.float32).at[:n, :n].set(
        jnp.asarray(mat, jnp.float32))


def sdg_forward(mat_p, idx, predictions, *, row_tile=128, force_hbm_gather=False):
    """out[i, :] = mat[idx[i], :] @ predictions, with mat pre-padded by sdg_prepare_mat."""
    n, f = predictions.shape
    b = idx.shape[0]
    n8, n_pad = mat_p.shape
    f_pad = _round_up(f, 128)

    # TODO(synk): on v6e/v7x prefer row_tile=256 and bf16 mat/pred storage with f32
    # accumulation; when B >> N, compute Y = mat @ predictions once and gather Y[idx].
    tb0 = min(row_tile, _round_up(b, 8))
    resident_need = _resident_need_bytes(n8, n_pad, f_pad, tb0)
    use_resident = (resident_need <= _VMEM_TARGET) and not force_hbm_gather

    tb = tb0 if use_resident else min(tb0, n8)
    b_pad = _round_up(b, tb)

    # Clamp indices (OOB HBM/VMEM reads are unchecked on TPU; PyTorch would raise
    # on bad indices instead) and pad the batch with index 0.
    idx_c = jnp.clip(jnp.asarray(idx, jnp.int32), 0, n - 1)
    idx_p = jnp.zeros((b_pad,), jnp.int32).at[:b].set(idx_c)

    # Per-call padding of the (small) activation input only; mat is pre-padded.
    pred_p = jnp.zeros((n_pad, f_pad), jnp.float32).at[:n, :f].set(
        jnp.asarray(predictions, jnp.float32))

    if use_resident:
        out = _sdg_resident_call(idx_p, mat_p, pred_p, tb, resident_need)
    else:
        # TODO(synk): for very large N also tile the K (N_pad) dim of predictions.
        tf = _choose_f_tile(n_pad, f_pad, tb)
        out = _sdg_gather_call(idx_p, mat_p, pred_p, tb, tf,
                               _gather_need_bytes(n_pad, tb, tf))

    return out[:b, :f]


# ----------------------------------------------------------------------------
if __name__ == "__main__":
    random.seed(0)
    np_rng = np.random.RandomState(0)

    N = 16      # number of graph nodes
    F = 32      # prediction feature / class dim
    B = 8       # number of query indices
    alpha = 0.1

    # Deterministic symmetric 0/1 adjacency with zero diagonal.
    upper = (np_rng.rand(N, N) < 0.3).astype(np.float64)
    adj = np.triu(upper, k=1)
    adj = adj + adj.T

    masked_adj = mask_adj_matrix(adj)
    ppr_mat = calc_ppr_exact(masked_adj, alpha)
    t_ppr = track_ppr(adj, masked_adj, ppr_mat, alpha)       # == self.mat buffer

    mat = jnp.asarray(t_ppr, dtype=jnp.float32)
    mat_p = sdg_prepare_mat(mat)                             # hoisted: pad once at init

    key = jax.random.PRNGKey(0)
    k1, k2 = jax.random.split(key)
    predictions = jax.random.normal(k1, (N, F), dtype=jnp.float32)
    idx = jax.random.randint(k2, (B,), 0, N, dtype=jnp.int32)

    ref = np.take(np.asarray(mat, dtype=np.float64), np.asarray(idx), axis=0) @ np.asarray(
        predictions, dtype=np.float64)

    # Small-problem fast path (mat resident in VMEM, one-hot gather on the MXU).
    out_resident = jax.block_until_ready(sdg_forward(mat_p, idx, predictions))
    np.testing.assert_allclose(np.asarray(out_resident), ref, rtol=1e-4, atol=1e-4)

    # Large-N path (HBM row gather, double-buffered manual DMA), forced to verify it too.
    out_gather = jax.block_until_ready(
        sdg_forward(mat_p, idx, predictions, force_hbm_gather=True))
    np.testing.assert_allclose(np.asarray(out_gather), ref, rtol=1e-4, atol=1e-4)

    print("KERNEL_OK")
</pallas_src>

<mosaic_0001>
module attributes {stable_mosaic.version = 11 : i64} {
  func.func @_sdg_resident_kernel(%arg0: i32, %arg1: memref<8x1xi32, #tpu.memory_space<vmem>>, %arg2: memref<16x128xf32, #tpu.memory_space<vmem>>, %arg3: memref<128x128xf32, #tpu.memory_space<vmem>>, %arg4: memref<8x128xf32, #tpu.memory_space<vmem>>) attributes {dimension_semantics = [#tpu.dimension_semantics<parallel>], iteration_bounds = array<i64: 1>, scalar_prefetch = 0 : i64, scratch_operands = 0 : i64, tpu.core_type = #tpu.core_type<tc>, window_params = [{transform_indices = @transform_0, window_bounds = array<i64: 8, 1>}, {pipeline_mode = #tpu.pipeline_mode<synchronous>, transform_indices = @transform_1, window_bounds = array<i64: 16, 128>}, {pipeline_mode = #tpu.pipeline_mode<synchronous>, transform_indices = @transform_2, window_bounds = array<i64: 128, 128>}, {transform_indices = @transform_3, window_bounds = array<i64: 8, 128>}]} {
    %c0 = arith.constant 0 : index
    %c0_0 = arith.constant 0 : index
    %0 = vector.load %arg1[%c0, %c0_0] : memref<8x1xi32, #tpu.memory_space<vmem>>, vector<8x1xi32>
    %1 = tpu.iota {dimensions = array<i32: 1>} : vector<8x16xi32>
    %2 = vector.broadcast %0 : vector<8x1xi32> to vector<8x16xi32>
    %3 = arith.cmpi eq, %1, %2 : vector<8x16xi32>
    %4 = arith.extui %3 : vector<8x16xi1> to vector<8x16xi32>
    %5 = arith.sitofp %4 : vector<8x16xi32> to vector<8x16xf32>
    %c0_1 = arith.constant 0 : index
    %c0_2 = arith.constant 0 : index
    %6 = vector.load %arg2[%c0_1, %c0_2] : memref<16x128xf32, #tpu.memory_space<vmem>>, vector<16x128xf32>
    %cst = arith.constant dense<0.000000e+00> : vector<8x128xf32>
    %7 = tpu.matmul %5, %6, %cst {dimension_numbers = #tpu.dot_dimension_numbers<[1], [0], [0], [1], [0, 0, 1, 1], [], []>} : vector<8x16xf32>, vector<16x128xf32>, vector<8x128xf32> -> vector<8x128xf32>
    %c0_3 = arith.constant 0 : index
    %c0_4 = arith.constant 0 : index
    %8 = vector.load %arg3[%c0_3, %c0_4] : memref<128x128xf32, #tpu.memory_space<vmem>>, vector<128x128xf32>
    %cst_5 = arith.constant dense<0.000000e+00> : vector<8x128xf32>
    %9 = tpu.matmul %7, %8, %cst_5 {dimension_numbers = #tpu.dot_dimension_numbers<[1], [0], [0], [1], [0, 0, 1, 1], [], []>} : vector<8x128xf32>, vector<128x128xf32>, vector<8x128xf32> -> vector<8x128xf32>
    %c0_6 = arith.constant 0 : index
    %c0_7 = arith.constant 0 : index
    %10 = vector.load %arg4[%c0_6, %c0_7] : memref<8x128xf32, #tpu.memory_space<vmem>>, vector<8x128xf32>
    tpu.vector_store %arg4[%c0_6, %c0_7], %9 {strides = array<i32>} : memref<8x128xf32, #tpu.memory_space<vmem>>, vector<8x128xf32>,
    return
  }
  func.func @transform_0(%arg0: i32) -> (i32, i32) {
    %c0_i32 = arith.constant 0 : i32
    %c0_i32_0 = arith.constant 0 : i32
    return %arg0, %c0_i32 : i32, i32
  }
  func.func @transform_1(%arg0: i32) -> (i32, i32) {
    %c0_i32 = arith.constant 0 : i32
    %c0_i32_0 = arith.constant 0 : i32
    %c0_i32_1 = arith.constant 0 : i32
    return %c0_i32, %c0_i32_0 : i32, i32
  }
  func.func @transform_2(%arg0: i32) -> (i32, i32) {
    %c0_i32 = arith.constant 0 : i32
    %c0_i32_0 = arith.constant 0 : i32
    %c0_i32_1 = arith.constant 0 : i32
    return %c0_i32, %c0_i32_0 : i32, i32
  }
  func.func @transform_3(%arg0: i32) -> (i32, i32) {
    %c0_i32 = arith.constant 0 : i32
    %c0_i32_0 = arith.constant 0 : i32
    return %arg0, %c0_i32 : i32, i32
  }
}

</mosaic_0001>

<llo_original>
// kernel: tpu_custom_call.1
$region0: #{tpu_custom_call.1}
  #allocation0 [shape = 'u32[]', space=smem, size = 0x4, offset = 0x4, fixed_abs, tag = 'smem constant byte address 0x4 - core index']
  #allocation1 [shape = 'u32[144,128]{1,0:T(1,128)}', space=vmem, size = 0x12000, scoped, tag = 'internal scratch']
  %s0 = inlined_call_operand.vmem [shape: s32[8,1], index: 0, kind: input, shape index: {}]
  %s1 = inlined_call_operand.hbm [shape: f32[16,128], index: 1, kind: input, shape index: {}]
  %s2 = inlined_call_operand.hbm [shape: f32[128,128], index: 2, kind: input, shape index: {}]
  %s3 = inlined_call_operand.hbm [shape: f32[8,128], index: 3, kind: output, shape index: {}]
  %s4 = sld [smem:[#allocation0]]
  $region30: #{tpu_custom_call.1} parent=0
    _
  %s6 = ssub.s32 1, %s4
  %s7 = scalar_select 0, %s6, %s4
  $region1: #{tpu_custom_call.1} parent=0
    #allocation2 [shape = 'u8[8192]{0}', space=vmem, size = 0x2000, scoped, tag = 'input window, operand 1, single buffered']
    #allocation3 [shape = 's32[1]{0}', space=sflag, size = 0x4, scoped, tag = 'scoped memory for tpu_custom_call.1']
    #allocation4 [shape = 's32[1]{0}', space=sflag, size = 0x4, scoped, tag = 'scoped memory for tpu_custom_call.1']
    #allocation5 [shape = 'u8[65536]{0}', space=vmem, size = 0x10000, scoped, tag = 'input window, operand 2, single buffered']
    #allocation6 [shape = 's32[1]{0}', space=sflag, size = 0x4, scoped, tag = 'scoped memory for tpu_custom_call.1']
    #allocation7 [shape = 'u8[4096]{0}', space=vmem, size = 0x1000, scoped, tag = 'output window, operand 0, single buffered']
    %8 = vsyncpa [#allocation3], 0
    %9 = vsyncpa [#allocation6], 0
    %10 = vsyncpa [#allocation4], 0
    // Predicated region
    $region2: #{tpu_custom_call.1} parent=1 // pred_check
      _
    $region3: #{tpu_custom_call.1} parent=1 // pred_check_branch
      %12 = sbr.rel (0) target = $region5
    $region4: #{tpu_custom_call.1} parent=1 // pred_region
      _
    $region5: #{tpu_custom_call.1} parent=1 // pred_fallthru
      _
    // Predicated region
    $region6: #{tpu_custom_call.1} parent=1 // pred_check
      _
    $region7: #{tpu_custom_call.1} parent=1 // pred_check_branch
      %14 = sbr.rel (0) target = $region9
    $region8: #{tpu_custom_call.1} parent=1 // pred_region
      %s16 = ssub.s32 256, 256
      %17 = vsyncadd [#allocation3], %s16
      %s18 = sshll.u32 [#allocation2], 4
      %s19 = int_to_ptr.vmem [resolvable:$true] %s18
      %24 = dma.hbm_to_vmem [thread:$0]  %s1, 256, %s19, [#allocation3], 128, 128, 8
    $region9: #{tpu_custom_call.1} parent=1 // pred_fallthru
      _
    // Predicated region
    $region10: #{tpu_custom_call.1} parent=1 // pred_check
      _
    $region11: #{tpu_custom_call.1} parent=1 // pred_check_branch
      %26 = sbr.rel (0) target = $region13
    $region12: #{tpu_custom_call.1} parent=1 // pred_region
      %s28 = ssub.s32 2048, 2048
      %29 = vsyncadd [#allocation6], %s28
      %s30 = sshll.u32 [#allocation5], 4
      %s31 = int_to_ptr.vmem [resolvable:$true] %s30
      %36 = dma.hbm_to_vmem [thread:$0]  %s2, 2048, %s31, [#allocation6], 128, 128, 8
    $region13: #{tpu_custom_call.1} parent=1 // pred_fallthru
      _
    // Predicated region
    $region14: #{tpu_custom_call.1} parent=1 // pred_check
      _
    $region15: #{tpu_custom_call.1} parent=1 // pred_check_branch
      %38 = sbr.rel (0) target = $region17
    $region16: #{tpu_custom_call.1} parent=1 // pred_region
      %39 = dma.done [#allocation3], 256
    $region17: #{tpu_custom_call.1} parent=1 // pred_fallthru
      _
    // Predicated region
    $region18: #{tpu_custom_call.1} parent=1 // pred_check
      _
    $region19: #{tpu_custom_call.1} parent=1 // pred_check_branch
      %41 = sbr.rel (0) target = $region21
    $region20: #{tpu_custom_call.1} parent=1 // pred_region
      %42 = dma.done [#allocation6], 2048
    $region21: #{tpu_custom_call.1} parent=1 // pred_fallthru
      _
    %v43 = vld [vmem:[%s0] sm:$0xff]
    %v44 = vlaneseq
    %v45 = vand.u32 %v44, 127
    %46 = vset.pattern.permute.xlu0 0
    %47 = vperm.xlu0 %46, %v43
    %v48 = vpop.permute.xlu0 %47
    %vm49 = vcmp.eq.s32.totalorder %v45, %v48
    %v50 = vsel %vm49, 1, 0
    %v51 = vcvt.s32.f32 %v50
    %v52 = vld [vmem:[#allocation2] sm:$0xff]
    %v53 = vld [vmem:[#allocation2 + $0x8] sm:$0xff]
    %vm54 = vcmask 130048
    %v56 = vsel %vm54, %v51, 0
    %58 = vmatprep.subr.mxu0 0.0
    %59 = vmatpush1.msra.mxu0 0.0
    %60 = vmatprep.subr.mxu0 0.0
    %61 = vmatpush1.msra.mxu0 0.0
    %62 = vmatprep.subr.mxu0 0.0
    %63 = vmatpush1.msra.mxu0 0.0
    %64 = vmatprep.subr.mxu0 0.0
    %65 = vmatpush1.msra.mxu0 0.0
    %66 = vmatprep.subr.mxu0 0.0
    %67 = vmatpush1.msra.mxu0 0.0
    %68 = vmatprep.subr.mxu0 0.0
    %69 = vmatpush1.msra.mxu0 0.0
    %70 = vmatprep.subr.mxu0 0.0
    %71 = vmatpush1.msra.mxu0 0.0
    %72 = vmatprep.subr.mxu0 0.0
    %73 = vmatpush1.msra.mxu0 0.0
    %74 = vmatprep.subr.mxu0 0.0
    %75 = vmatpush1.msra.mxu0 0.0
    %76 = vmatprep.subr.mxu0 0.0
    %77 = vmatpush1.msra.mxu0 0.0
    %78 = vmatprep.subr.mxu0 0.0
    %79 = vmatpush1.msra.mxu0 0.0
    %80 = vmatprep.subr.mxu0 0.0
    %81 = vmatpush1.msra.mxu0 0.0
    %82 = vmatprep.subr.mxu0 0.0
    %83 = vmatpush1.msra.mxu0 0.0
    %84 = vmatprep.subr.mxu0 0.0
    %85 = vmatpush1.msra.mxu0 0.0
    %86 = vmatprep.subr.mxu0 0.0
    %87 = vmatpush1.msra.mxu0 %v53
    %88 = vmatprep.subr.mxu0 0.0
    %89 = vmatpush1.msra.mxu0 %v52
    %90 = vmatprep.subr.mxu0 0.0
    %91 = vmatpush2.msra.mxu0 0.0
    %92 = vmatprep.subr.mxu0 0.0
    %93 = vmatpush2.msra.mxu0 0.0
    %94 = vmatprep.subr.mxu0 0.0
    %95 = vmatpush2.msra.mxu0 0.0
    %96 = vmatprep.subr.mxu0 0.0
    %97 = vmatpush2.msra.mxu0 0.0
    %98 = vmatprep.subr.mxu0 0.0
    %99 = vmatpush2.msra.mxu0 0.0
    %100 = vmatprep.subr.mxu0 0.0
    %101 = vmatpush2.msra.mxu0 0.0
    %102 = vmatprep.subr.mxu0 0.0
    %103 = vmatpush2.msra.mxu0 0.0
    %104 = vmatprep.subr.mxu0 0.0
    %105 = vmatpush2.msra.mxu0 0.0
    %106 = vmatprep.subr.mxu0 0.0
    %107 = vmatpush2.msra.mxu0 0.0
    %108 = vmatprep.subr.mxu0 0.0
    %109 = vmatpush2.msra.mxu0 0.0
    %110 = vmatprep.subr.mxu0 0.0
    %111 = vmatpush2.msra.mxu0 0.0
    %112 = vmatprep.subr.mxu0 0.0
    %113 = vmatpush2.msra.mxu0 0.0
    %114 = vmatprep.subr.mxu0 0.0
    %115 = vmatpush2.msra.mxu0 0.0
    %116 = vmatprep.subr.mxu0 0.0
    %117 = vmatpush2.msra.mxu0 0.0
    %118 = vmatprep.subr.mxu0 0.0
    %119 = vmatpush2.msra.mxu0 0.0
    %120 = vmatprep.subr.mxu0 0.0
    %121 = vmatpush2.msra.mxu0 0.0
    %122 = vmatprep.mubr.f32.mxu0 0.0
    %123 = vmatmul.mubr.f32.gmra.mxu0 %v56
    %v124 = vpop.f32.mrf.mxu0
    %v125 = vadd.f32 0.0, %v124
    %v126 = vpop.f32.mrf.mxu0
    %127 = vdwg.mxu0
    %v128 = vld [vmem:[#allocation5] sm:$0xff]
    %v129 = vld [vmem:[#allocation5 + $0x8] sm:$0xff]
    %v130 = vld [vmem:[#allocation5 + $0x10] sm:$0xff]
    %v131 = vld [vmem:[#allocation5 + $0x18] sm:$0xff]
    %v132 = vld [vmem:[#allocation5 + $0x20] sm:$0xff]
    %v133 = vld [vmem:[#allocation5 + $0x28] sm:$0xff]
    %v134 = vld [vmem:[#allocation5 + $0x30] sm:$0xff]
    %v135 = vld [vmem:[#allocation5 + $0x38] sm:$0xff]
    %v136 = vld [vmem:[#allocation5 + $0x40] sm:$0xff]
    %v137 = vld [vmem:[#allocation5 + $0x48] sm:$0xff]
    %v138 = vld [vmem:[#allocation5 + $0x50] sm:$0xff]
    %v139 = vld [vmem:[#allocation5 + $0x58] sm:$0xff]
    %v140 = vld [vmem:[#allocation5 + $0x60] sm:$0xff]
    %v141 = vld [vmem:[#allocation5 + $0x68] sm:$0xff]
    %v142 = vld [vmem:[#allocation5 + $0x70] sm:$0xff]
    %v143 = vld [vmem:[#allocation5 + $0x78] sm:$0xff]
    %144 = vmatprep.subr.mxu0 0.0
    %145 = vmatpush1.msra.mxu0 %v143
    %146 = vmatprep.subr.mxu0 0.0
    %147 = vmatpush1.msra.mxu0 %v142
    %148 = vmatprep.subr.mxu0 0.0
    %149 = vmatpush1.msra.mxu0 %v141
    %150 = vmatprep.subr.mxu0 0.0
    %151 = vmatpush1.msra.mxu0 %v140
    %152 = vmatprep.subr.mxu0 0.0
    %153 = vmatpush1.msra.mxu0 %v139
    %154 = vmatprep.subr.mxu0 0.0
    %155 = vmatpush1.msra.mxu0 %v138
    %156 = vmatprep.subr.mxu0 0.0
    %157 = vmatpush1.msra.mxu0 %v137
    %158 = vmatprep.subr.mxu0 0.0
    %159 = vmatpush1.msra.mxu0 %v136
    %160 = vmatprep.subr.mxu0 0.0
    %161 = vmatpush1.msra.mxu0 %v135
    %162 = vmatprep.subr.mxu0 0.0
    %163 = vmatpush1.msra.mxu0 %v134
    %164 = vmatprep.subr.mxu0 0.0
    %165 = vmatpush1.msra.mxu0 %v133
    %166 = vmatprep.subr.mxu0 0.0
    %167 = vmatpush1.msra.mxu0 %v132
    %168 = vmatprep.subr.mxu0 0.0
    %169 = vmatpush1.msra.mxu0 %v131
    %170 = vmatprep.subr.mxu0 0.0
    %171 = vmatpush1.msra.mxu0 %v130
    %172 = vmatprep.subr.mxu0 0.0
    %173 = vmatpush1.msra.mxu0 %v129
    %174 = vmatprep.subr.mxu0 0.0
    %175 = vmatpush1.msra.mxu0 %v128
    %176 = vmatprep.subr.mxu0 0.0
    %177 = vmatpush2.msra.mxu0 0.0
    %178 = vmatprep.subr.mxu0 0.0
    %179 = vmatpush2.msra.mxu0 0.0
    %180 = vmatprep.subr.mxu0 0.0
    %181 = vmatpush2.msra.mxu0 0.0
    %182 = vmatprep.subr.mxu0 0.0
    %183 = vmatpush2.msra.mxu0 0.0
    %184 = vmatprep.subr.mxu0 0.0
    %185 = vmatpush2.msra.mxu0 0.0
    %186 = vmatprep.subr.mxu0 0.0
    %187 = vmatpush2.msra.mxu0 0.0
    %188 = vmatprep.subr.mxu0 0.0
    %189 = vmatpush2.msra.mxu0 0.0
    %190 = vmatprep.subr.mxu0 0.0
    %191 = vmatpush2.msra.mxu0 0.0
    %192 = vmatprep.subr.mxu0 0.0
    %193 = vmatpush2.msra.mxu0 0.0
    %194 = vmatprep.subr.mxu0 0.0
    %195 = vmatpush2.msra.mxu0 0.0
    %196 = vmatprep.subr.mxu0 0.0
    %197 = vmatpush2.msra.mxu0 0.0
    %198 = vmatprep.subr.mxu0 0.0
    %199 = vmatpush2.msra.mxu0 0.0
    %200 = vmatprep.subr.mxu0 0.0
    %201 = vmatpush2.msra.mxu0 0.0
    %202 = vmatprep.subr.mxu0 0.0
    %203 = vmatpush2.msra.mxu0 0.0
    %204 = vmatprep.subr.mxu0 0.0
    %205 = vmatpush2.msra.mxu0 0.0
    %206 = vmatprep.subr.mxu0 0.0
    %207 = vmatpush2.msra.mxu0 0.0
    %208 = vmatprep.mubr.f32.mxu0 0.0
    %209 = vmatmul.mubr.f32.gmra.mxu0 %v125
    %v210 = vpop.f32.mrf.mxu0
    %v211 = vadd.f32 0.0, %v210
    %v212 = vpop.f32.mrf.mxu0
    %213 = vdwg.mxu0
    %214 = vst [vmem:[#allocation7] sm:$0xff] %v211
    // Predicated region
    $region22: #{tpu_custom_call.1} parent=1 // pred_check
      _
    $region23: #{tpu_custom_call.1} parent=1 // pred_check_branch
      %216 = sbr.rel (0) target = $region25
    $region24: #{tpu_custom_call.1} parent=1 // pred_region
      %s218 = ssub.s32 128, 128
      %219 = vsyncadd [#allocation4], %s218
      %s221 = sshll.u32 [#allocation7], 4
      %s222 = int_to_ptr.vmem [resolvable:$true] %s221
      %224 = dma.vmem_to_hbm [thread:$0]  %s222, 128, %s3, [#allocation4]
    $region25: #{tpu_custom_call.1} parent=1 // pred_fallthru
      _
    // Predicated region
    $region26: #{tpu_custom_call.1} parent=1 // pred_check
      _
    $region27: #{tpu_custom_call.1} parent=1 // pred_check_branch
      %226 = sbr.rel (0) target = $region29
    $region28: #{tpu_custom_call.1} parent=1 // pred_region
      %227 = dma.done [#allocation4], 128
    $region29: #{tpu_custom_call.1} parent=1 // pred_fallthru
      _
    %228 = vsyncpa [#allocation3], 1
    %229 = vsyncpa [#allocation6], 1
    %230 = vsyncpa [#allocation4], 1

</llo_original>
